<compile_context>
chip_gen: v6e
topology: v6e:2x2x1
jax: 0.10.0
libtpu: 0.0.40
codegen_flags: <defaults>
</compile_context>

<pallas_src>
import functools

import jax
import jax.numpy as jnp
from jax.experimental import pallas as pl
from jax.experimental.pallas import tpu as pltpu

_LANES = 128
_SUBLANES = 8
_MAX_TILE_BYTES = 2 * 1024 * 1024   # per-tile cap; x4 resident (in+out, 2-deep buffering)
_MIN_GRID = 4                       # keep >=4 parallel steps on big inputs (v7x megacore)


def _schlick_kernel(x_ref, o_ref, *, a, eps):
    """Fused elementwise Schlick gain on one (block_rows, 128) VMEM tile."""
    x = jnp.clip(x_ref[...].astype(jnp.float32), 0.0, 1.0)
    mask = x < 0.5
    # Fold both branches into a single division:
    #   left  : t = 2x     , c = 1/a     - 2, out = 0.5 * t/(1 + c*(1-t)) + eps
    #   right : t = 2x - 1 , c = 1/(1-a) - 2, out = 0.5 * t/(1 + c*(1-t)) + 0.5 + eps
    c_left = 1.0 / a - 2.0              # Python floats -> constant-folded at trace time
    c_right = 1.0 / (1.0 - a) - 2.0
    t = jnp.where(mask, 2.0 * x, 2.0 * x - 1.0)
    c = jnp.where(mask, c_left, c_right)
    y = t / (1.0 + c * (1.0 - t))
    out = 0.5 * y + jnp.where(mask, eps, 0.5 + eps)
    o_ref[...] = out.astype(o_ref.dtype)


def voxel_to_element_schlick(voxel, a, eps=1e-07):
    """Pallas equivalent of VoxelToElementSchlick(a).forward(voxel).

    Returns a flat 1-D array (same dtype and length as voxel.reshape(-1)).
    """
    x = jnp.asarray(voxel)
    dtype = x.dtype
    flat = x.reshape(-1)
    n = flat.shape[0]
    if n == 0:
        return flat

    # View the flat buffer as a (rows, 128) slab. Pad only when numel is not a
    # multiple of 8*128 (demo input needs no pad, so no extra HBM pass).
    chunk = _SUBLANES * _LANES
    n_pad = pl.cdiv(n, chunk) * chunk
    padded = n_pad != n
    if padded:
        flat = jnp.pad(flat, (0, n_pad - n))
    rows = n_pad // _LANES              # always a multiple of 8
    x2d = flat.reshape(rows, _LANES)

    # Tile sizing: big tiles (up to _MAX_TILE_BYTES) amortize the ~0.35us
    # per-grid-step overhead; keep >= _MIN_GRID steps on large inputs so both
    # v7x TensorCores are used; tiny inputs become a single full-array block.
    itemsize = jnp.dtype(dtype).itemsize
    max_block_rows = max(_SUBLANES, _MAX_TILE_BYTES // (_LANES * itemsize))
    if rows > max_block_rows:
        block_rows = min(max_block_rows, pl.cdiv(rows, _MIN_GRID))
        block_rows = max(_SUBLANES, (block_rows // _SUBLANES) * _SUBLANES)
    else:
        block_rows = rows               # single block (full-array dims)
    num_blocks = pl.cdiv(rows, block_rows)

    kernel = functools.partial(_schlick_kernel, a=float(a), eps=float(eps))

    out2d = pl.pallas_call(
        kernel,
        out_shape=jax.ShapeDtypeStruct((rows, _LANES), dtype),
        grid=(num_blocks,),
        in_specs=[pl.BlockSpec((block_rows, _LANES), lambda i: (i, 0))],
        out_specs=pl.BlockSpec((block_rows, _LANES), lambda i: (i, 0)),
        compiler_params=pltpu.CompilerParams(
            dimension_semantics=("parallel",),
            vmem_limit_bytes=32 * 1024 * 1024,   # <= physical VMEM on v5e/v6e/v7x
        ),
    )(x2d)

    out = out2d.reshape(-1)
    if padded:
        out = out[:n]
    return out


def _reference(voxel, a, eps=1e-07):
    """Pure-JAX reference mirroring the PyTorch forward (two-branch form)."""
    x = jnp.clip(jnp.asarray(voxel, jnp.float32).reshape(-1), 0.0, 1.0)

    def bias(t, p):
        return t / (1.0 + (1.0 / p - 2.0) * (1.0 - t))

    left = 0.5 * bias(2.0 * x, a)
    right = 0.5 * (bias(2.0 * x - 1.0, 1.0 - a) + 1.0)
    return jnp.where(x < 0.5, left, right) + eps


def _check(x, a, eps):
    out = jax.block_until_ready(voxel_to_element_schlick(x, a, eps))
    ref = _reference(x, a, eps)
    assert out.shape == (x.size,), (out.shape, x.size)
    err = jnp.max(jnp.abs(out - ref))
    assert jnp.allclose(out, ref, atol=1e-6, rtol=1e-6), f"max abs err = {err}"
    return out


if __name__ == "__main__":
    # Deterministic "parameters" (module __init__ hyperparameters).
    a = 0.3
    eps = 1e-07

    key = jax.random.PRNGKey(0)
    k0, k1, k2 = jax.random.split(key, 3)

    # Primary small voxel input; values outside [0, 1] exercise the clamp.
    x = jax.random.uniform(k0, (2, 4, 16, 16), dtype=jnp.float32,
                           minval=-0.25, maxval=1.25)
    _check(x, a, eps)

    # Multi-block path (rows > max_block_rows -> parallel grid of 4 tiles).
    x_big = jax.random.uniform(k1, (4, 16, 96, 96), dtype=jnp.float32,
                               minval=-0.25, maxval=1.25)
    _check(x_big, a, eps)

    # Non-multiple-of-1024 size exercises the (rare) pad + slice path.
    x_odd = jax.random.uniform(k2, (3, 5, 7, 11), dtype=jnp.float32,
                               minval=-0.25, maxval=1.25)
    _check(x_odd, a, eps)

    # TODO(synk): the cooptimizer/alpha (VoxelToElementBinary) branch depends on
    # host-side mesh lookup dicts and is not used when binary is None.
    print("KERNEL_OK")
</pallas_src>

<mosaic_0001>
module attributes {stable_mosaic.version = 11 : i64} {
  func.func @_schlick_kernel(%arg0: i32, %arg1: memref<16x128xf32, #tpu.memory_space<vmem>>, %arg2: memref<16x128xf32, #tpu.memory_space<vmem>>) attributes {dimension_semantics = [#tpu.dimension_semantics<parallel>], iteration_bounds = array<i64: 1>, scalar_prefetch = 0 : i64, scratch_operands = 0 : i64, tpu.core_type = #tpu.core_type<tc>, window_params = [{transform_indices = @transform_0, window_bounds = array<i64: 16, 128>}, {transform_indices = @transform_1, window_bounds = array<i64: 16, 128>}]} {
    %c0 = arith.constant 0 : index
    %c0_0 = arith.constant 0 : index
    %0 = vector.load %arg1[%c0, %c0_0] : memref<16x128xf32, #tpu.memory_space<vmem>>, vector<16x128xf32>
    %cst = arith.constant 0.000000e+00 : f32
    %cst_1 = arith.constant 1.000000e+00 : f32
    %1 = vector.broadcast %cst : f32 to vector<16x128xf32>
    %2 = arith.maximumf %1, %0 : vector<16x128xf32>
    %3 = vector.broadcast %cst_1 : f32 to vector<16x128xf32>
    %4 = arith.minimumf %3, %2 : vector<16x128xf32>
    %cst_2 = arith.constant 5.000000e-01 : f32
    %5 = vector.broadcast %cst_2 : f32 to vector<16x128xf32>
    %6 = arith.cmpf olt, %4, %5 : vector<16x128xf32>
    %cst_3 = arith.constant 2.000000e+00 : f32
    %7 = vector.broadcast %cst_3 : f32 to vector<16x128xf32>
    %8 = arith.mulf %7, %4 : vector<16x128xf32>
    %cst_4 = arith.constant 2.000000e+00 : f32
    %9 = vector.broadcast %cst_4 : f32 to vector<16x128xf32>
    %10 = arith.mulf %9, %4 : vector<16x128xf32>
    %cst_5 = arith.constant 1.000000e+00 : f32
    %11 = vector.broadcast %cst_5 : f32 to vector<16x128xf32>
    %12 = arith.subf %10, %11 : vector<16x128xf32>
    %13 = arith.select %6, %8, %12 : vector<16x128xi1>, vector<16x128xf32>
    %cst_6 = arith.constant 1.33333337 : f32
    %cst_7 = arith.constant -0.571428597 : f32
    %14 = vector.broadcast %cst_6 : f32 to vector<16x128xf32>
    %15 = vector.broadcast %cst_7 : f32 to vector<16x128xf32>
    %16 = arith.select %6, %14, %15 : vector<16x128xi1>, vector<16x128xf32>
    %cst_8 = arith.constant 1.000000e+00 : f32
    %17 = vector.broadcast %cst_8 : f32 to vector<16x128xf32>
    %18 = arith.subf %17, %13 : vector<16x128xf32>
    %19 = arith.mulf %16, %18 : vector<16x128xf32>
    %cst_9 = arith.constant 1.000000e+00 : f32
    %20 = vector.broadcast %cst_9 : f32 to vector<16x128xf32>
    %21 = arith.addf %20, %19 : vector<16x128xf32>
    %22 = arith.divf %13, %21 : vector<16x128xf32>
    %cst_10 = arith.constant 5.000000e-01 : f32
    %23 = vector.broadcast %cst_10 : f32 to vector<16x128xf32>
    %24 = arith.mulf %23, %22 : vector<16x128xf32>
    %cst_11 = arith.constant 1.000000e-07 : f32
    %cst_12 = arith.constant 0.500000119 : f32
    %25 = vector.broadcast %cst_11 : f32 to vector<16x128xf32>
    %26 = vector.broadcast %cst_12 : f32 to vector<16x128xf32>
    %27 = arith.select %6, %25, %26 : vector<16x128xi1>, vector<16x128xf32>
    %28 = arith.addf %24, %27 : vector<16x128xf32>
    %c0_13 = arith.constant 0 : index
    %c0_14 = arith.constant 0 : index
    %29 = vector.load %arg2[%c0_13, %c0_14] : memref<16x128xf32, #tpu.memory_space<vmem>>, vector<16x128xf32>
    tpu.vector_store %arg2[%c0_13, %c0_14], %28 {strides = array<i32>} : memref<16x128xf32, #tpu.memory_space<vmem>>, vector<16x128xf32>,
    return
  }
  func.func @transform_0(%arg0: i32) -> (i32, i32) {
    %c0_i32 = arith.constant 0 : i32
    %c0_i32_0 = arith.constant 0 : i32
    return %arg0, %c0_i32 : i32, i32
  }
  func.func @transform_1(%arg0: i32) -> (i32, i32) {
    %c0_i32 = arith.constant 0 : i32
    %c0_i32_0 = arith.constant 0 : i32
    return %arg0, %c0_i32 : i32, i32
  }
}

</mosaic_0001>

<llo_original>
// kernel: tpu_custom_call.1
$region0: #{tpu_custom_call.1}
  #allocation0 [shape = 'u32[]', space=smem, size = 0x4, offset = 0x4, fixed_abs, tag = 'smem constant byte address 0x4 - core index']
  #allocation1 [shape = 'u32[144,128]{1,0:T(1,128)}', space=vmem, size = 0x12000, scoped, tag = 'internal scratch']
  %s0 = inlined_call_operand.hbm [shape: f32[16,128], index: 0, kind: input, shape index: {}]
  %s1 = inlined_call_operand.hbm [shape: f32[16,128], index: 1, kind: output, shape index: {}]
  %s2 = sld [smem:[#allocation0]]
  $region18: #{tpu_custom_call.1} parent=0
    _
  %s4 = ssub.s32 1, %s2
  %s5 = scalar_select 0, %s4, %s2
  $region1: #{tpu_custom_call.1} parent=0
    #allocation2 [shape = 'u8[8192]{0}', space=vmem, size = 0x2000, scoped, tag = 'input window, operand 0, single buffered']
    #allocation3 [shape = 's32[1]{0}', space=sflag, size = 0x4, scoped, tag = 'scoped memory for tpu_custom_call.1']
    #allocation4 [shape = 's32[1]{0}', space=sflag, size = 0x4, scoped, tag = 'scoped memory for tpu_custom_call.1']
    #allocation5 [shape = 'u8[8192]{0}', space=vmem, size = 0x2000, scoped, tag = 'output window, operand 0, single buffered']
    %6 = vsyncpa [#allocation3], 0
    %7 = vsyncpa [#allocation4], 0
    // Predicated region
    $region2: #{tpu_custom_call.1} parent=1 // pred_check
      _
    $region3: #{tpu_custom_call.1} parent=1 // pred_check_branch
      %9 = sbr.rel (0) target = $region5
    $region4: #{tpu_custom_call.1} parent=1 // pred_region
      %s11 = ssub.s32 256, 256
      %12 = vsyncadd [#allocation3], %s11
      %s13 = sshll.u32 [#allocation2], 4
      %s14 = int_to_ptr.vmem [resolvable:$true] %s13
      %19 = dma.hbm_to_vmem [thread:$0]  %s0, 256, %s14, [#allocation3], 128, 128, 8
    $region5: #{tpu_custom_call.1} parent=1 // pred_fallthru
      _
    // Predicated region
    $region6: #{tpu_custom_call.1} parent=1 // pred_check
      _
    $region7: #{tpu_custom_call.1} parent=1 // pred_check_branch
      %21 = sbr.rel (0) target = $region9
    $region8: #{tpu_custom_call.1} parent=1 // pred_region
      %22 = dma.done [#allocation3], 256
    $region9: #{tpu_custom_call.1} parent=1 // pred_fallthru
      _
    %v23 = vld [vmem:[#allocation2] sm:$0xff]
    %v24 = vld [vmem:[#allocation2 + $0x8] sm:$0xff]
    %v25 = vmax.f32 %v23, 0.0
    %v26 = vmax.f32 %v24, 0.0
    %v27 = vmin.f32 %v25, 1.0
    %v28 = vmin.f32 %v26, 1.0
    %vm29 = vcmp.lt.f32.partialorder %v27, 0.5
    %vm30 = vcmp.lt.f32.partialorder %v28, 0.5
    %v31 = vmul.f32 %v27, 2.0
    %v32 = vmul.f32 %v28, 2.0
    %v33 = vsub.f32 %v31, 1.0
    %v34 = vsub.f32 %v32, 1.0
    %v35 = vsel %vm29, %v31, %v33
    %v36 = vsel %vm30, %v32, %v34
    %v37 = vsel %vm29, 1.3333334, -0.5714286
    %v38 = vsel %vm30, 1.3333334, -0.5714286
    %v39 = vsub.f32 1.0, %v35
    %v40 = vsub.f32 1.0, %v36
    %v41 = vmul.f32 %v37, %v39
    %v42 = vmul.f32 %v38, %v40
    %v43 = vadd.f32 %v41, 1.0
    %v44 = vadd.f32 %v42, 1.0
    %v45 = vrcp.pop %v43
    %v46 = vmul.f32 %v35, %v45
    %v47 = vrcp.pop %v44
    %v48 = vmul.f32 %v36, %v47
    %v49 = vmul.f32 %v46, 0.5
    %v50 = vmul.f32 %v48, 0.5
    %v51 = vsel %vm29, 1e-07, 0.5000001
    %v52 = vsel %vm30, 1e-07, 0.5000001
    %v53 = vadd.f32 %v49, %v51
    %v54 = vadd.f32 %v50, %v52
    %55 = vst [vmem:[#allocation5] sm:$0xff] %v53
    %56 = vst [vmem:[#allocation5 + $0x8] sm:$0xff] %v54
    // Predicated region
    $region10: #{tpu_custom_call.1} parent=1 // pred_check
      _
    $region11: #{tpu_custom_call.1} parent=1 // pred_check_branch
      %58 = sbr.rel (0) target = $region13
    $region12: #{tpu_custom_call.1} parent=1 // pred_region
      %s60 = ssub.s32 256, 256
      %61 = vsyncadd [#allocation4], %s60
      %s62 = sshll.u32 [#allocation5], 4
      %s63 = int_to_ptr.vmem [resolvable:$true] %s62
      %68 = dma.vmem_to_hbm [thread:$0]  %s63, 256, %s1, [#allocation4], 128, 128, 8
    $region13: #{tpu_custom_call.1} parent=1 // pred_fallthru
      _
    // Predicated region
    $region14: #{tpu_custom_call.1} parent=1 // pred_check
      _
    $region15: #{tpu_custom_call.1} parent=1 // pred_check_branch
      %70 = sbr.rel (0) target = $region17
    $region16: #{tpu_custom_call.1} parent=1 // pred_region
      %71 = dma.done [#allocation4], 256
    $region17: #{tpu_custom_call.1} parent=1 // pred_fallthru
      _
    %72 = vsyncpa [#allocation3], 1
    %73 = vsyncpa [#allocation4], 1

</llo_original>
